<compile_context>
chip_gen: v6e
topology: v6e:2x2x1
jax: 0.10.0
libtpu: 0.0.40
codegen_flags: <defaults>
</compile_context>

<pallas_src>
import functools

import jax
import jax.numpy as jnp
from jax import lax
from jax.experimental import pallas as pl
from jax.experimental.pallas import tpu as pltpu


def _round_up(x: int, m: int) -> int:
    return ((x + m - 1) // m) * m


def inner_gnn_kernel(msg_ref, scat_ref, x_ref,
                     w1_ref, b1_ref, w2_ref, b2_ref,
                     gamma_ref, beta_ref,
                     o_ref, acc_ref,
                     *, feat_actual: int, eps: float = 1e-5):
    """Grid = (node_tiles, edge_tiles); edge axis is the reduction (innermost)."""
    k = pl.program_id(1)

    @pl.when(k == 0)
    def _():
        acc_ref[...] = jnp.zeros_like(acc_ref)

    # --- SimpleGIN scatter-sum for this (node_tile, edge_tile) ---
    # Messages arrive pre-combined (src feats + edge feats) in fp32.  Split them
    # hi/lo into bf16 so the MXU runs two cheap bf16 passes with fp32 accumulation
    # instead of a 3-6x multi-pass f32 matmul; the 0/1 one-hot stays bf16 (exact).
    msg = msg_ref[...]                                            # (TE, F_pad) f32
    msg_hi = msg.astype(jnp.bfloat16)
    msg_lo = (msg - msg_hi.astype(jnp.float32)).astype(jnp.bfloat16)
    scat = scat_ref[...]                                          # (TM, TE) bf16 0/1
    acc_ref[...] += (
        jnp.dot(scat, msg_hi, preferred_element_type=jnp.float32)
        + jnp.dot(scat, msg_lo, preferred_element_type=jnp.float32))

    # --- finalize: MLP + LayerNorm + SqrtGraphNorm + ReLU + residual ---
    @pl.when(k == pl.num_programs(1) - 1)
    def _():
        agg = acc_ref[...]                                        # (TM, F_pad) f32

        # MLP kept in fp32: it runs once per node tile (epilogue) and fp32 keeps
        # the forward numerically identical to the PyTorch module.
        h = jnp.dot(agg, w1_ref[...], preferred_element_type=jnp.float32) + b1_ref[...]
        h = jnp.maximum(h, 0.0)
        h = jnp.dot(h, w2_ref[...], preferred_element_type=jnp.float32) + b2_ref[...]

        # LayerNorm over the real feature lanes.  Padded lanes of h are exactly 0
        # (w2/b2 zero-padded) so the mean needs no mask; only the variance term
        # masks out the (h - mean) contribution of padded lanes.
        inv_f = 1.0 / feat_actual
        mean = jnp.sum(h, axis=-1, keepdims=True) * inv_f
        lane = lax.broadcasted_iota(jnp.int32, h.shape, 1)
        diff = jnp.where(lane < feat_actual, h - mean, 0.0)
        var = jnp.sum(diff * diff, axis=-1, keepdims=True) * inv_f
        h = diff * lax.rsqrt(var + eps)

        # gamma/beta already carry the 1/sqrt(num_nodes) SqrtGraphNorm factor and
        # are zero on padded lanes (so padded output lanes stay exactly 0).
        h = h * gamma_ref[...] + beta_ref[...]

        # last activation (has_last_act=True); dropout is identity in eval mode.
        h = jnp.maximum(h, 0.0)

        # residual
        o_ref[...] = h + x_ref[...]


def inner_gnn_forward(node_feats, edge_feats, src_idx, dst_idx, params,
                      *, tile_m: int = 1024, tile_e: int = 2048):
    """Wrapper: padding to lane width, message precompute, one-hot scatter, tiling."""
    w1, b1, w2, b2, gamma, beta = params
    n, f = node_feats.shape
    e = edge_feats.shape[0]
    h_dim = w1.shape[1]
    assert w2.shape[1] == f, "residual requires out_feat_size == in_feat_size"

    f32 = jnp.float32
    f_pad = _round_up(f, 128)                  # lane-dense feature dim
    h_pad = _round_up(h_dim, 128)              # lane-dense hidden dim

    # node tiling (rows of the output / scatter matrix)
    n_pad = _round_up(n, 8)
    tm = min(tile_m, n_pad)
    # Keep >=2 node tiles once each half-tile still has >=128 rows, so the
    # "parallel" node axis can feed both TensorCores on v7x.  (On v5e/v6e this
    # only costs one extra pass over the edge stream for mid-size graphs.)
    if n_pad // tm < 2 and n_pad >= 256:
        tm = _round_up(n_pad // 2, 8)
    n_pad = _round_up(n_pad, tm)

    # edge tiling (reduction axis)
    e_pad = _round_up(e, 128)
    te = min(tile_e, e_pad)
    e_pad = _round_up(e_pad, te)

    # --- pad feature tensors (zeros in padded rows / lanes) ---
    x_p = jnp.zeros((n_pad, f_pad), f32).at[:n, :f].set(node_feats)

    # Pre-combined messages: gather source rows + add edge feats once in the
    # wrapper -> single streamed (E_pad, F_pad) array (half the edge-side bytes).
    # TODO(synk): fuse this gather in-kernel (scalar-prefetched src_idx + row DMAs)
    #             to overlap it with the scatter matmul.
    msg = node_feats[src_idx] + edge_feats                          # (E, F) f32
    msg_p = jnp.zeros((e_pad, f_pad), f32).at[:e, :f].set(msg)

    # Scatter one-hot built directly as (N_pad, E_pad) bf16 (0/1 exact); padded
    # edges get dst=-1 which never matches a node id -> all-zero column.  No
    # (E,N) one_hot + transpose pass in HBM.
    dst_p = jnp.full((e_pad,), -1, jnp.int32).at[:e].set(dst_idx.astype(jnp.int32))
    node_ids = lax.broadcasted_iota(jnp.int32, (n_pad, e_pad), 0)
    scat = (node_ids == dst_p[None, :]).astype(jnp.bfloat16)        # (N_pad, E_pad)

    # --- pad parameters; fold SqrtGraphNorm into gamma/beta ---
    w1_p = jnp.zeros((f_pad, h_pad), f32).at[:f, :h_dim].set(w1)
    b1_p = jnp.zeros((1, h_pad), f32).at[:, :h_dim].set(b1.reshape(1, -1))
    w2_p = jnp.zeros((h_pad, f_pad), f32).at[:h_dim, :f].set(w2)
    b2_p = jnp.zeros((1, f_pad), f32).at[:, :f].set(b2.reshape(1, -1))

    inv_sqrt_n = 1.0 / jnp.sqrt(jnp.asarray(n, f32))
    gamma_p = jnp.zeros((1, f_pad), f32).at[:, :f].set(gamma.reshape(1, -1) * inv_sqrt_n)
    beta_p = jnp.zeros((1, f_pad), f32).at[:, :f].set(beta.reshape(1, -1) * inv_sqrt_n)

    # --- VMEM budget computed from actual tile footprint (cap 40 MiB for v7x) ---
    streamed = te * f_pad * 4 + tm * te * 2 + 2 * tm * f_pad * 4     # msg + scat + x + out
    params_b = 2 * f_pad * h_pad * 4 + (h_pad + 3 * f_pad) * 4
    footprint = 2 * (streamed + params_b) + tm * f_pad * 4           # x2 buffers + acc
    vmem_limit = int(min(max(2 * footprint, 16 << 20), 40 << 20))

    grid = (n_pad // tm, e_pad // te)
    kernel = functools.partial(inner_gnn_kernel, feat_actual=f)

    def full_spec(shape):
        return pl.BlockSpec(shape, lambda i, k: (0, 0))

    out = pl.pallas_call(
        kernel,
        out_shape=jax.ShapeDtypeStruct((n_pad, f_pad), f32),
        grid_spec=pltpu.PrefetchScalarGridSpec(
            num_scalar_prefetch=0,
            grid=grid,
            in_specs=[
                pl.BlockSpec((te, f_pad), lambda i, k: (k, 0)),   # pre-combined messages
                pl.BlockSpec((tm, te),    lambda i, k: (i, k)),   # scatter one-hot (bf16)
                pl.BlockSpec((tm, f_pad), lambda i, k: (i, 0)),   # node feats (residual)
                full_spec((f_pad, h_pad)),                        # w1
                full_spec((1, h_pad)),                            # b1
                full_spec((h_pad, f_pad)),                        # w2
                full_spec((1, f_pad)),                            # b2
                full_spec((1, f_pad)),                            # gamma * 1/sqrt(N)
                full_spec((1, f_pad)),                            # beta  * 1/sqrt(N)
            ],
            out_specs=pl.BlockSpec((tm, f_pad), lambda i, k: (i, 0)),
            scratch_shapes=[pltpu.VMEM((tm, f_pad), jnp.float32)],
        ),
        compiler_params=pltpu.CompilerParams(
            dimension_semantics=("parallel", "arbitrary"),
            vmem_limit_bytes=vmem_limit,
        ),
    )(msg_p, scat, x_p, w1_p, b1_p, w2_p, b2_p, gamma_p, beta_p)

    return out[:n, :f]


def reference_forward(node_feats, edge_feats, src_idx, dst_idx, params):
    """Pure-JAX reference for a correctness check."""
    w1, b1, w2, b2, gamma, beta = params
    num_nodes = node_feats.shape[0]
    msg = node_feats[src_idx] + edge_feats
    agg = jnp.zeros_like(node_feats).at[dst_idx].add(msg)
    h = jnp.maximum(agg @ w1 + b1, 0.0) @ w2 + b2
    mean = h.mean(-1, keepdims=True)
    var = ((h - mean) ** 2).mean(-1, keepdims=True)
    h = (h - mean) / jnp.sqrt(var + 1e-5) * gamma + beta
    h = h / jnp.sqrt(float(num_nodes))
    h = jnp.maximum(h, 0.0)
    return h + node_feats


if __name__ == "__main__":
    # small shapes consistent with the module
    num_nodes, num_edges = 8, 16
    in_feat = out_feat = 32
    hidden = 64

    key = jax.random.PRNGKey(0)
    k = jax.random.split(key, 10)

    node_feats = jax.random.normal(k[0], (num_nodes, in_feat), jnp.float32)
    edge_feats = jax.random.normal(k[1], (num_edges, in_feat), jnp.float32)
    src_idx = jax.random.randint(k[2], (num_edges,), 0, num_nodes)
    dst_idx = jax.random.randint(k[3], (num_edges,), 0, num_nodes)

    # deterministic parameter init (synthetic, not a checkpoint)
    w1 = jax.random.normal(k[4], (in_feat, hidden), jnp.float32) * (1.0 / in_feat ** 0.5)
    b1 = jnp.zeros((1, hidden), jnp.float32)
    w2 = jax.random.normal(k[5], (hidden, out_feat), jnp.float32) * (1.0 / hidden ** 0.5)
    b2 = jnp.zeros((1, out_feat), jnp.float32)
    gamma = jnp.ones((1, out_feat), jnp.float32)   # LayerNorm weight
    beta = jnp.zeros((1, out_feat), jnp.float32)   # LayerNorm bias
    params = (w1, b1, w2, b2, gamma, beta)

    out = inner_gnn_forward(node_feats, edge_feats, src_idx, dst_idx, params)
    out = jax.block_until_ready(out)

    ref = reference_forward(node_feats, edge_feats, src_idx, dst_idx, params)
    assert out.shape == (num_nodes, out_feat)
    assert jnp.allclose(out, ref, atol=2e-4, rtol=2e-4), "mismatch vs reference"

    print("KERNEL_OK")
</pallas_src>

<mosaic_0001>
module attributes {stable_mosaic.version = 11 : i64} {
  func.func @inner_gnn_kernel(%arg0: i32, %arg1: i32, %arg2: memref<128x128xf32, #tpu.memory_space<vmem>>, %arg3: memref<8x128xbf16, #tpu.memory_space<vmem>>, %arg4: memref<8x128xf32, #tpu.memory_space<vmem>>, %arg5: memref<128x128xf32, #tpu.memory_space<vmem>>, %arg6: memref<1x128xf32, #tpu.memory_space<vmem>>, %arg7: memref<128x128xf32, #tpu.memory_space<vmem>>, %arg8: memref<1x128xf32, #tpu.memory_space<vmem>>, %arg9: memref<1x128xf32, #tpu.memory_space<vmem>>, %arg10: memref<1x128xf32, #tpu.memory_space<vmem>>, %arg11: memref<8x128xf32, #tpu.memory_space<vmem>>, %arg12: memref<8x128xf32, #tpu.memory_space<vmem>>) attributes {dimension_semantics = [#tpu.dimension_semantics<parallel>, #tpu.dimension_semantics<arbitrary>], iteration_bounds = array<i64: 1, 1>, scalar_prefetch = 0 : i64, scratch_operands = 1 : i64, tpu.core_type = #tpu.core_type<tc>, window_params = [{transform_indices = @transform_0, window_bounds = array<i64: 128, 128>}, {transform_indices = @transform_1, window_bounds = array<i64: 8, 128>}, {transform_indices = @transform_2, window_bounds = array<i64: 8, 128>}, {pipeline_mode = #tpu.pipeline_mode<synchronous>, transform_indices = @transform_3, window_bounds = array<i64: 128, 128>}, {pipeline_mode = #tpu.pipeline_mode<synchronous>, transform_indices = @transform_4, window_bounds = array<i64: 1, 128>}, {pipeline_mode = #tpu.pipeline_mode<synchronous>, transform_indices = @transform_5, window_bounds = array<i64: 128, 128>}, {pipeline_mode = #tpu.pipeline_mode<synchronous>, transform_indices = @transform_6, window_bounds = array<i64: 1, 128>}, {pipeline_mode = #tpu.pipeline_mode<synchronous>, transform_indices = @transform_7, window_bounds = array<i64: 1, 128>}, {pipeline_mode = #tpu.pipeline_mode<synchronous>, transform_indices = @transform_8, window_bounds = array<i64: 1, 128>}, {transform_indices = @transform_9, window_bounds = array<i64: 8, 128>}]} {
    %c0_i32 = arith.constant 0 : i32
    %0 = arith.cmpi eq, %arg1, %c0_i32 : i32
    %1 = arith.extui %0 : i1 to i32
    %c0_i32_0 = arith.constant 0 : i32
    %2 = arith.cmpi ne, %1, %c0_i32_0 : i32
    scf.if %2 {
      %cst_11 = arith.constant 0.000000e+00 : f32
      %18 = vector.broadcast %cst_11 : f32 to vector<8x128xf32>
      %c0_12 = arith.constant 0 : index
      %c0_13 = arith.constant 0 : index
      %19 = vector.load %arg12[%c0_12, %c0_13] : memref<8x128xf32, #tpu.memory_space<vmem>>, vector<8x128xf32>
      tpu.vector_store %arg12[%c0_12, %c0_13], %18 {strides = array<i32>} : memref<8x128xf32, #tpu.memory_space<vmem>>, vector<8x128xf32>,
    } else {
    }
    %c0 = arith.constant 0 : index
    %c0_1 = arith.constant 0 : index
    %3 = vector.load %arg2[%c0, %c0_1] : memref<128x128xf32, #tpu.memory_space<vmem>>, vector<128x128xf32>
    %4 = arith.truncf %3 : vector<128x128xf32> to vector<128x128xbf16>
    %5 = arith.extf %4 : vector<128x128xbf16> to vector<128x128xf32>
    %6 = arith.subf %3, %5 : vector<128x128xf32>
    %7 = arith.truncf %6 : vector<128x128xf32> to vector<128x128xbf16>
    %c0_2 = arith.constant 0 : index
    %c0_3 = arith.constant 0 : index
    %8 = vector.load %arg3[%c0_2, %c0_3] : memref<8x128xbf16, #tpu.memory_space<vmem>>, vector<8x128xbf16>
    %c0_4 = arith.constant 0 : index
    %c0_5 = arith.constant 0 : index
    %9 = vector.load %arg12[%c0_4, %c0_5] : memref<8x128xf32, #tpu.memory_space<vmem>>, vector<8x128xf32>
    %cst = arith.constant dense<0.000000e+00> : vector<8x128xf32>
    %10 = tpu.matmul %8, %4, %cst {dimension_numbers = #tpu.dot_dimension_numbers<[1], [0], [0], [1], [0, 0, 1, 1], [], []>} : vector<8x128xbf16>, vector<128x128xbf16>, vector<8x128xf32> -> vector<8x128xf32>
    %cst_6 = arith.constant dense<0.000000e+00> : vector<8x128xf32>
    %11 = tpu.matmul %8, %7, %cst_6 {dimension_numbers = #tpu.dot_dimension_numbers<[1], [0], [0], [1], [0, 0, 1, 1], [], []>} : vector<8x128xbf16>, vector<128x128xbf16>, vector<8x128xf32> -> vector<8x128xf32>
    %12 = arith.addf %10, %11 : vector<8x128xf32>
    %13 = arith.addf %9, %12 : vector<8x128xf32>
    %c0_7 = arith.constant 0 : index
    %c0_8 = arith.constant 0 : index
    %14 = vector.load %arg12[%c0_7, %c0_8] : memref<8x128xf32, #tpu.memory_space<vmem>>, vector<8x128xf32>
    tpu.vector_store %arg12[%c0_7, %c0_8], %13 {strides = array<i32>} : memref<8x128xf32, #tpu.memory_space<vmem>>, vector<8x128xf32>,
    %c0_i32_9 = arith.constant 0 : i32
    %15 = arith.cmpi eq, %arg1, %c0_i32_9 : i32
    %16 = arith.extui %15 : i1 to i32
    %c0_i32_10 = arith.constant 0 : i32
    %17 = arith.cmpi ne, %16, %c0_i32_10 : i32
    scf.if %17 {
      %c0_11 = arith.constant 0 : index
      %c0_12 = arith.constant 0 : index
      %18 = vector.load %arg12[%c0_11, %c0_12] : memref<8x128xf32, #tpu.memory_space<vmem>>, vector<8x128xf32>
      %c0_13 = arith.constant 0 : index
      %c0_14 = arith.constant 0 : index
      %19 = vector.load %arg5[%c0_13, %c0_14] : memref<128x128xf32, #tpu.memory_space<vmem>>, vector<128x128xf32>
      %cst_15 = arith.constant dense<0.000000e+00> : vector<8x128xf32>
      %20 = tpu.matmul %18, %19, %cst_15 {dimension_numbers = #tpu.dot_dimension_numbers<[1], [0], [0], [1], [0, 0, 1, 1], [], []>} : vector<8x128xf32>, vector<128x128xf32>, vector<8x128xf32> -> vector<8x128xf32>
      %c0_16 = arith.constant 0 : index
      %c0_17 = arith.constant 0 : index
      %21 = vector.load %arg6[%c0_16, %c0_17] : memref<1x128xf32, #tpu.memory_space<vmem>>, vector<1x128xf32>
      %22 = vector.broadcast %21 : vector<1x128xf32> to vector<8x128xf32>
      %23 = arith.addf %20, %22 : vector<8x128xf32>
      %cst_18 = arith.constant 0.000000e+00 : f32
      %24 = vector.broadcast %cst_18 : f32 to vector<8x128xf32>
      %25 = arith.maximumf %23, %24 : vector<8x128xf32>
      %c0_19 = arith.constant 0 : index
      %c0_20 = arith.constant 0 : index
      %26 = vector.load %arg7[%c0_19, %c0_20] : memref<128x128xf32, #tpu.memory_space<vmem>>, vector<128x128xf32>
      %cst_21 = arith.constant dense<0.000000e+00> : vector<8x128xf32>
      %27 = tpu.matmul %25, %26, %cst_21 {dimension_numbers = #tpu.dot_dimension_numbers<[1], [0], [0], [1], [0, 0, 1, 1], [], []>} : vector<8x128xf32>, vector<128x128xf32>, vector<8x128xf32> -> vector<8x128xf32>
      %c0_22 = arith.constant 0 : index
      %c0_23 = arith.constant 0 : index
      %28 = vector.load %arg8[%c0_22, %c0_23] : memref<1x128xf32, #tpu.memory_space<vmem>>, vector<1x128xf32>
      %29 = vector.broadcast %28 : vector<1x128xf32> to vector<8x128xf32>
      %30 = arith.addf %27, %29 : vector<8x128xf32>
      %cst_24 = arith.constant dense<0.000000e+00> : vector<8xf32>
      %31 = vector.multi_reduction <add>, %30, %cst_24 [1] : vector<8x128xf32> to vector<8xf32>
      %32 = vector.shape_cast %31 : vector<8xf32> to vector<8x1xf32>
      %cst_25 = arith.constant 3.125000e-02 : f32
      %33 = vector.broadcast %cst_25 : f32 to vector<8x1xf32>
      %34 = arith.mulf %32, %33 : vector<8x1xf32>
      %35 = tpu.iota {dimensions = array<i32: 1>} : vector<8x128xi32>
      %c32_i32 = arith.constant 32 : i32
      %36 = vector.broadcast %c32_i32 : i32 to vector<8x128xi32>
      %37 = arith.cmpi slt, %35, %36 : vector<8x128xi32>
      %38 = vector.broadcast %34 : vector<8x1xf32> to vector<8x128xf32>
      %39 = arith.subf %30, %38 : vector<8x128xf32>
      %cst_26 = arith.constant 0.000000e+00 : f32
      %40 = vector.broadcast %cst_26 : f32 to vector<8x128xf32>
      %41 = arith.select %37, %39, %40 : vector<8x128xi1>, vector<8x128xf32>
      %42 = arith.mulf %41, %41 : vector<8x128xf32>
      %cst_27 = arith.constant dense<0.000000e+00> : vector<8xf32>
      %43 = vector.multi_reduction <add>, %42, %cst_27 [1] : vector<8x128xf32> to vector<8xf32>
      %44 = vector.shape_cast %43 : vector<8xf32> to vector<8x1xf32>
      %cst_28 = arith.constant 3.125000e-02 : f32
      %45 = vector.broadcast %cst_28 : f32 to vector<8x1xf32>
      %46 = arith.mulf %44, %45 : vector<8x1xf32>
      %cst_29 = arith.constant 9.99999974E-6 : f32
      %47 = vector.broadcast %cst_29 : f32 to vector<8x1xf32>
      %48 = arith.addf %46, %47 : vector<8x1xf32>
      %49 = math.rsqrt %48 : vector<8x1xf32>
      %50 = vector.broadcast %49 : vector<8x1xf32> to vector<8x128xf32>
      %51 = arith.mulf %41, %50 : vector<8x128xf32>
      %c0_30 = arith.constant 0 : index
      %c0_31 = arith.constant 0 : index
      %52 = vector.load %arg9[%c0_30, %c0_31] : memref<1x128xf32, #tpu.memory_space<vmem>>, vector<1x128xf32>
      %53 = vector.broadcast %52 : vector<1x128xf32> to vector<8x128xf32>
      %54 = arith.mulf %51, %53 : vector<8x128xf32>
      %c0_32 = arith.constant 0 : index
      %c0_33 = arith.constant 0 : index
      %55 = vector.load %arg10[%c0_32, %c0_33] : memref<1x128xf32, #tpu.memory_space<vmem>>, vector<1x128xf32>
      %56 = vector.broadcast %55 : vector<1x128xf32> to vector<8x128xf32>
      %57 = arith.addf %54, %56 : vector<8x128xf32>
      %cst_34 = arith.constant 0.000000e+00 : f32
      %58 = vector.broadcast %cst_34 : f32 to vector<8x128xf32>
      %59 = arith.maximumf %57, %58 : vector<8x128xf32>
      %c0_35 = arith.constant 0 : index
      %c0_36 = arith.constant 0 : index
      %60 = vector.load %arg4[%c0_35, %c0_36] : memref<8x128xf32, #tpu.memory_space<vmem>>, vector<8x128xf32>
      %61 = arith.addf %59, %60 : vector<8x128xf32>
      %c0_37 = arith.constant 0 : index
      %c0_38 = arith.constant 0 : index
      %62 = vector.load %arg11[%c0_37, %c0_38] : memref<8x128xf32, #tpu.memory_space<vmem>>, vector<8x128xf32>
      tpu.vector_store %arg11[%c0_37, %c0_38], %61 {strides = array<i32>} : memref<8x128xf32, #tpu.memory_space<vmem>>, vector<8x128xf32>,
    } else {
    }
    return
  }
  func.func @transform_0(%arg0: i32, %arg1: i32) -> (i32, i32) {
    %c0_i32 = arith.constant 0 : i32
    %c0_i32_0 = arith.constant 0 : i32
    return %arg1, %c0_i32 : i32, i32
  }
  func.func @transform_1(%arg0: i32, %arg1: i32) -> (i32, i32) {
    %c0_i32 = arith.constant 0 : i32
    return %arg0, %arg1 : i32, i32
  }
  func.func @transform_2(%arg0: i32, %arg1: i32) -> (i32, i32) {
    %c0_i32 = arith.constant 0 : i32
    %c0_i32_0 = arith.constant 0 : i32
    return %arg0, %c0_i32 : i32, i32
  }
  func.func @transform_3(%arg0: i32, %arg1: i32) -> (i32, i32) {
    %c0_i32 = arith.constant 0 : i32
    %c0_i32_0 = arith.constant 0 : i32
    %c0_i32_1 = arith.constant 0 : i32
    return %c0_i32, %c0_i32_0 : i32, i32
  }
  func.func @transform_4(%arg0: i32, %arg1: i32) -> (i32, i32) {
    %c0_i32 = arith.constant 0 : i32
    %c0_i32_0 = arith.constant 0 : i32
    %c0_i32_1 = arith.constant 0 : i32
    return %c0_i32, %c0_i32_0 : i32, i32
  }
  func.func @transform_5(%arg0: i32, %arg1: i32) -> (i32, i32) {
    %c0_i32 = arith.constant 0 : i32
    %c0_i32_0 = arith.constant 0 : i32
    %c0_i32_1 = arith.constant 0 : i32
    return %c0_i32, %c0_i32_0 : i32, i32
  }
  func.func @transform_6(%arg0: i32, %arg1: i32) -> (i32, i32) {
    %c0_i32 = arith.constant 0 : i32
    %c0_i32_0 = arith.constant 0 : i32
    %c0_i32_1 = arith.constant 0 : i32
    return %c0_i32, %c0_i32_0 : i32, i32
  }
  func.func @transform_7(%arg0: i32, %arg1: i32) -> (i32, i32) {
    %c0_i32 = arith.constant 0 : i32
    %c0_i32_0 = arith.constant 0 : i32
    %c0_i32_1 = arith.constant 0 : i32
    return %c0_i32, %c0_i32_0 : i32, i32
  }
  func.func @transform_8(%arg0: i32, %arg1: i32) -> (i32, i32) {
    %c0_i32 = arith.constant 0 : i32
    %c0_i32_0 = arith.constant 0 : i32
    %c0_i32_1 = arith.constant 0 : i32
    return %c0_i32, %c0_i32_0 : i32, i32
  }
  func.func @transform_9(%arg0: i32, %arg1: i32) -> (i32, i32) {
    %c0_i32 = arith.constant 0 : i32
    %c0_i32_0 = arith.constant 0 : i32
    return %arg0, %c0_i32 : i32, i32
  }
}

</mosaic_0001>

<llo_original>
// kernel: tpu_custom_call.1
$region0: #{tpu_custom_call.1}
  #allocation0 [shape = 'u32[]', space=smem, size = 0x4, offset = 0x4, fixed_abs, tag = 'smem constant byte address 0x4 - core index']
  #allocation1 [shape = 'u32[144,128]{1,0:T(1,128)}', space=vmem, size = 0x12000, scoped, tag = 'internal scratch']
  #allocation2 [shape = 'f32[8,128]{1,0:T(8,128)}', space=vmem, size = 0x1000, scoped, tag = 'scratch operand']
  %s0 = inlined_call_operand.hbm [shape: f32[128,128], index: 0, kind: input, shape index: {}]
  %s1 = inlined_call_operand.hbm [shape: bf16[8,128], index: 1, kind: input, shape index: {}]
  %s2 = inlined_call_operand.hbm [shape: f32[8,128], index: 2, kind: input, shape index: {}]
  %s3 = inlined_call_operand.hbm [shape: f32[128,128], index: 3, kind: input, shape index: {}]
  %s4 = inlined_call_operand.vmem [shape: f32[1,128], index: 4, kind: input, shape index: {}]
  %s5 = inlined_call_operand.hbm [shape: f32[128,128], index: 5, kind: input, shape index: {}]
  %s6 = inlined_call_operand.vmem [shape: f32[1,128], index: 6, kind: input, shape index: {}]
  %s7 = inlined_call_operand.vmem [shape: f32[1,128], index: 7, kind: input, shape index: {}]
  %s8 = inlined_call_operand.vmem [shape: f32[1,128], index: 8, kind: input, shape index: {}]
  %s9 = inlined_call_operand.hbm [shape: f32[8,128], index: 9, kind: output, shape index: {}]
  %s10 = sld [smem:[#allocation0]]
  $region74: #{tpu_custom_call.1} parent=0
    _
  %s12 = ssub.s32 1, %s10
  %s13 = scalar_select 0, %s12, %s10
  $region1: #{tpu_custom_call.1} parent=0
    #allocation3 [shape = 'u8[65536]{0}', space=vmem, size = 0x10000, scoped, tag = 'input window, operand 0, single buffered']
    #allocation4 [shape = 's32[1]{0}', space=sflag, size = 0x4, scoped, tag = 'scoped memory for tpu_custom_call.1']
    #allocation5 [shape = 's32[1]{0}', space=sflag, size = 0x4, scoped, tag = 'scoped memory for tpu_custom_call.1']
    #allocation6 [shape = 'u8[2048]{0}', space=vmem, size = 0x800, scoped, tag = 'input window, operand 1, single buffered']
    #allocation7 [shape = 's32[1]{0}', space=sflag, size = 0x4, scoped, tag = 'scoped memory for tpu_custom_call.1']
    #allocation8 [shape = 'u8[4096]{0}', space=vmem, size = 0x1000, scoped, tag = 'input window, operand 2, single buffered']
    #allocation9 [shape = 'u8[65536]{0}', space=vmem, size = 0x10000, scoped, tag = 'input window, operand 3, single buffered']
    #allocation10 [shape = 's32[1]{0}', space=sflag, size = 0x4, scoped, tag = 'scoped memory for tpu_custom_call.1']
    #allocation11 [shape = 'u8[65536]{0}', space=vmem, size = 0x10000, scoped, tag = 'input window, operand 5, single buffered']
    #allocation12 [shape = 'u8[4096]{0}', space=vmem, size = 0x1000, scoped, tag = 'output window, operand 0, single buffered']
    %14 = vsyncpa [#allocation4], 0
    %15 = vsyncpa [#allocation7], 0
    %16 = vsyncpa [#allocation10], 0
    %17 = vsyncpa [#allocation5], 0
    // Predicated region
    $region2: #{tpu_custom_call.1} parent=1 // pred_check
      _
    $region3: #{tpu_custom_call.1} parent=1 // pred_check_branch
      %19 = sbr.rel (0) target = $region5
    $region4: #{tpu_custom_call.1} parent=1 // pred_region
      %s21 = ssub.s32 2048, 2048
      %22 = vsyncadd [#allocation4], %s21
      %s23 = sshll.u32 [#allocation3], 4
      %s24 = int_to_ptr.vmem [resolvable:$true] %s23
      %29 = dma.hbm_to_vmem [thread:$0]  %s0, 2048, %s24, [#allocation4], 128, 128, 8
    $region5: #{tpu_custom_call.1} parent=1 // pred_fallthru
      _
    // Predicated region
    $region6: #{tpu_custom_call.1} parent=1 // pred_check
      _
    $region7: #{tpu_custom_call.1} parent=1 // pred_check_branch
      %31 = sbr.rel (0) target = $region9
    $region8: #{tpu_custom_call.1} parent=1 // pred_region
      %s33 = ssub.s32 64, 64
      %34 = vsyncadd [#allocation7], %s33
      %s36 = sshll.u32 [#allocation6], 4
      %s37 = int_to_ptr.vmem [resolvable:$true] %s36
      %39 = dma.hbm_to_vmem [thread:$0]  %s1, 64, %s37, [#allocation7]
    $region9: #{tpu_custom_call.1} parent=1 // pred_fallthru
      _
    // Predicated region
    $region10: #{tpu_custom_call.1} parent=1 // pred_check
      _
    $region11: #{tpu_custom_call.1} parent=1 // pred_check_branch
      %41 = sbr.rel (0) target = $region13
    $region12: #{tpu_custom_call.1} parent=1 // pred_region
      %s43 = ssub.s32 128, 128
      %44 = vsyncadd [#allocation7], %s43
      %s46 = sshll.u32 [#allocation8], 4
      %s47 = int_to_ptr.vmem [resolvable:$true] %s46
      %49 = dma.hbm_to_vmem [thread:$0]  %s2, 128, %s47, [#allocation7]
    $region13: #{tpu_custom_call.1} parent=1 // pred_fallthru
      _
    // Predicated region
    $region14: #{tpu_custom_call.1} parent=1 // pred_check
      _
    $region15: #{tpu_custom_call.1} parent=1 // pred_check_branch
      %51 = sbr.rel (0) target = $region17
    $region16: #{tpu_custom_call.1} parent=1 // pred_region
      %s53 = ssub.s32 2048, 2048
      %54 = vsyncadd [#allocation10], %s53
      %s55 = sshll.u32 [#allocation9], 4
      %s56 = int_to_ptr.vmem [resolvable:$true] %s55
      %61 = dma.hbm_to_vmem [thread:$0]  %s3, 2048, %s56, [#allocation10], 128, 128, 8
    $region17: #{tpu_custom_call.1} parent=1 // pred_fallthru
      _
    // Predicated region
    $region18: #{tpu_custom_call.1} parent=1 // pred_check
      _
    $region19: #{tpu_custom_call.1} parent=1 // pred_check_branch
      %63 = sbr.rel (0) target = $region21
    $region20: #{tpu_custom_call.1} parent=1 // pred_region
      _
    $region21: #{tpu_custom_call.1} parent=1 // pred_fallthru
      _
    // Predicated region
    $region22: #{tpu_custom_call.1} parent=1 // pred_check
      _
    $region23: #{tpu_custom_call.1} parent=1 // pred_check_branch
      %65 = sbr.rel (0) target = $region25
    $region24: #{tpu_custom_call.1} parent=1 // pred_region
      %s67 = ssub.s32 2048, 2048
      %68 = vsyncadd [#allocation10], %s67
      %s69 = sshll.u32 [#allocation11], 4
      %s70 = int_to_ptr.vmem [resolvable:$true] %s69
      %75 = dma.hbm_to_vmem [thread:$0]  %s5, 2048, %s70, [#allocation10], 128, 128, 8
    $region25: #{tpu_custom_call.1} parent=1 // pred_fallthru
      _
    // Predicated region
    $region26: #{tpu_custom_call.1} parent=1 // pred_check
      _
    $region27: #{tpu_custom_call.1} parent=1 // pred_check_branch
      %77 = sbr.rel (0) target = $region29
    $region28: #{tpu_custom_call.1} parent=1 // pred_region
      _
    $region29: #{tpu_custom_call.1} parent=1 // pred_fallthru
      _
    // Predicated region
    $region30: #{tpu_custom_call.1} parent=1 // pred_check
      _
    $region31: #{tpu_custom_call.1} parent=1 // pred_check_branch
      %79 = sbr.rel (0) target = $region33
    $region32: #{tpu_custom_call.1} parent=1 // pred_region
      _
    $region33: #{tpu_custom_call.1} parent=1 // pred_fallthru
      _
    // Predicated region
    $region34: #{tpu_custom_call.1} parent=1 // pred_check
      _
    $region35: #{tpu_custom_call.1} parent=1 // pred_check_branch
      %81 = sbr.rel (0) target = $region37
    $region36: #{tpu_custom_call.1} parent=1 // pred_region
      _
    $region37: #{tpu_custom_call.1} parent=1 // pred_fallthru
      _
    // Predicated region
    $region38: #{tpu_custom_call.1} parent=1 // pred_check
      _
    $region39: #{tpu_custom_call.1} parent=1 // pred_check_branch
      %83 = sbr.rel (0) target = $region41
    $region40: #{tpu_custom_call.1} parent=1 // pred_region
      %84 = dma.done [#allocation4], 2048
    $region41: #{tpu_custom_call.1} parent=1 // pred_fallthru
      _
    // Predicated region
    $region42: #{tpu_custom_call.1} parent=1 // pred_check
      _
    $region43: #{tpu_custom_call.1} parent=1 // pred_check_branch
      %86 = sbr.rel (0) target = $region45
    $region44: #{tpu_custom_call.1} parent=1 // pred_region
      %87 = dma.done [#allocation7], 64
    $region45: #{tpu_custom_call.1} parent=1 // pred_fallthru
      _
    // Predicated region
    $region46: #{tpu_custom_call.1} parent=1 // pred_check
      _
    $region47: #{tpu_custom_call.1} parent=1 // pred_check_branch
      %89 = sbr.rel (0) target = $region49
    $region48: #{tpu_custom_call.1} parent=1 // pred_region
      %90 = dma.done [#allocation7], 128
    $region49: #{tpu_custom_call.1} parent=1 // pred_fallthru
      _
    // Predicated region
    $region50: #{tpu_custom_call.1} parent=1 // pred_check
      _
    $region51: #{tpu_custom_call.1} parent=1 // pred_check_branch
      %92 = sbr.rel (0) target = $region53
    $region52: #{tpu_custom_call.1} parent=1 // pred_region
      %93 = dma.done [#allocation10], 2048
    $region53: #{tpu_custom_call.1} parent=1 // pred_fallthru
      _
    // Predicated region
    $region54: #{tpu_custom_call.1} parent=1 // pred_check
      _
    $region55: #{tpu_custom_call.1} parent=1 // pred_check_branch
      %95 = sbr.rel (0) target = $region57
    $region56: #{tpu_custom_call.1} parent=1 // pred_region
      %96 = dma.done [#allocation10], 2048
    $region57: #{tpu_custom_call.1} parent=1 // pred_fallthru
      _
    %p98 = scmp.eq.s32.totalorder 0, 0
    // Predicated region
    $region58: #{tpu_custom_call.1} parent=1 // pred_check
      %p99 = pneg %p98
    $region59: #{tpu_custom_call.1} parent=1 // pred_check_branch
      %101 = sbr.rel (%p99) target = $region61
    $region60: #{tpu_custom_call.1} parent=1 // pred_region
      %102 = vst [vmem:[#allocation2] sm:$0xff] 0.0
    $region61: #{tpu_custom_call.1} parent=1 // pred_fallthru
      _
    %v103 = vld [vmem:[#allocation3] sm:$0xff]
    %v104 = vld [vmem:[#allocation3 + $0x8] sm:$0xff]
    %v105 = vld [vmem:[#allocation3 + $0x10] sm:$0xff]
    %v106 = vld [vmem:[#allocation3 + $0x18] sm:$0xff]
    %v107 = vld [vmem:[#allocation3 + $0x20] sm:$0xff]
    %v108 = vld [vmem:[#allocation3 + $0x28] sm:$0xff]
    %v109 = vld [vmem:[#allocation3 + $0x30] sm:$0xff]
    %v110 = vld [vmem:[#allocation3 + $0x38] sm:$0xff]
    %v111 = vld [vmem:[#allocation3 + $0x40] sm:$0xff]
    %v112 = vld [vmem:[#allocation3 + $0x48] sm:$0xff]
    %v113 = vld [vmem:[#allocation3 + $0x50] sm:$0xff]
    %v114 = vld [vmem:[#allocation3 + $0x58] sm:$0xff]
    %v115 = vld [vmem:[#allocation3 + $0x60] sm:$0xff]
    %v116 = vld [vmem:[#allocation3 + $0x68] sm:$0xff]
    %v117 = vld [vmem:[#allocation3 + $0x70] sm:$0xff]
    %v118 = vld [vmem:[#allocation3 + $0x78] sm:$0xff]
    %v119 = vpack.c.bf16 %v104, %v103
    %v120 = vpack.c.bf16 %v106, %v105
    %v121 = vpack.c.bf16 %v108, %v107
    %v122 = vpack.c.bf16 %v110, %v109
    %v123 = vpack.c.bf16 %v112, %v111
    %v124 = vpack.c.bf16 %v114, %v113
    %v125 = vpack.c.bf16 %v116, %v115
    %v126 = vpack.c.bf16 %v118, %v117
    %v127 = vunpack.c.l.bf16 %v119
    %v128 = vunpack.c.h.bf16 %v119
    %v129 = vunpack.c.l.bf16 %v120
    %v130 = vunpack.c.h.bf16 %v120
    %v131 = vunpack.c.l.bf16 %v121
    %v132 = vunpack.c.h.bf16 %v121
    %v133 = vunpack.c.l.bf16 %v122
    %v134 = vunpack.c.h.bf16 %v122
    %v135 = vunpack.c.l.bf16 %v123
    %v136 = vunpack.c.h.bf16 %v123
    %v137 = vunpack.c.l.bf16 %v124
    %v138 = vunpack.c.h.bf16 %v124
    %v139 = vunpack.c.l.bf16 %v125
    %v140 = vunpack.c.h.bf16 %v125
    %v141 = vunpack.c.l.bf16 %v126
    %v142 = vunpack.c.h.bf16 %v126
    %v143 = vsub.f32 %v103, %v127
    %v144 = vsub.f32 %v104, %v128
    %v145 = vsub.f32 %v105, %v129
    %v146 = vsub.f32 %v106, %v130
    %v147 = vsub.f32 %v107, %v131
    %v148 = vsub.f32 %v108, %v132
    %v149 = vsub.f32 %v109, %v133
    %v150 = vsub.f32 %v110, %v134
    %v151 = vsub.f32 %v111, %v135
    %v152 = vsub.f32 %v112, %v136
    %v153 = vsub.f32 %v113, %v137
    %v154 = vsub.f32 %v114, %v138
    %v155 = vsub.f32 %v115, %v139
    %v156 = vsub.f32 %v116, %v140
    %v157 = vsub.f32 %v117, %v141
    %v158 = vsub.f32 %v118, %v142
    %v159 = vpack.c.bf16 %v144, %v143
    %v160 = vpack.c.bf16 %v146, %v145
    %v161 = vpack.c.bf16 %v148, %v147
    %v162 = vpack.c.bf16 %v150, %v149
    %v163 = vpack.c.bf16 %v152, %v151
    %v164 = vpack.c.bf16 %v154, %v153
    %v165 = vpack.c.bf16 %v156, %v155
    %v166 = vpack.c.bf16 %v158, %v157
    %v167 = vld [vmem:[#allocation6] sm:$0xf]
    %v168 = vld [vmem:[#allocation2] sm:$0xff]
    %169 = vmatprep.subr.bf16.mxu0 0
    %170 = vmatpush1.bf16.msra.mxu0 %v166
    %171 = vmatprep.subr.bf16.mxu0 0
    %172 = vmatpush1.bf16.msra.mxu0 %v165
    %173 = vmatprep.subr.bf16.mxu0 0
    %174 = vmatpush1.bf16.msra.mxu0 %v164
    %175 = vmatprep.subr.bf16.mxu0 0
    %176 = vmatpush1.bf16.msra.mxu0 %v163
    %177 = vmatprep.subr.bf16.mxu0 0
    %178 = vmatpush1.bf16.msra.mxu0 %v162
    %179 = vmatprep.subr.bf16.mxu0 0
    %180 = vmatpush1.bf16.msra.mxu0 %v161
    %181 = vmatprep.subr.bf16.mxu0 0
    %182 = vmatpush1.bf16.msra.mxu0 %v160
    %183 = vmatprep.subr.bf16.mxu0 0
    %184 = vmatpush1.bf16.msra.mxu0 %v159
    %185 = vmatprep.subr.bf16.mxu0 0
    %186 = vmatpush2.bf16.msra.mxu0 0
    %187 = vmatprep.subr.bf16.mxu0 0
    %188 = vmatpush2.bf16.msra.mxu0 0
    %189 = vmatprep.subr.bf16.mxu0 0
    %190 = vmatpush2.bf16.msra.mxu0 0
    %191 = vmatprep.subr.bf16.mxu0 0
    %192 = vmatpush2.bf16.msra.mxu0 0
    %193 = vmatprep.subr.bf16.mxu0 0
    %194 = vmatpush2.bf16.msra.mxu0 0
    %195 = vmatprep.subr.bf16.mxu0 0
    %196 = vmatpush2.bf16.msra.mxu0 0
    %197 = vmatprep.subr.bf16.mxu0 0
    %198 = vmatpush2.bf16.msra.mxu0 0
    %199 = vmatprep.subr.bf16.mxu0 0
    %200 = vmatpush2.bf16.msra.mxu0 0
    %201 = vmatprep.mubr.bf16.mxu0 0
    %202 = vmatmul.mubr.bf16.gmra.mxu0 %v167
    %v203 = vpop.f32.mrf.mxu0
    %v204 = vadd.f32 0.0, %v203
    %v205 = vpop.f32.mrf.mxu0
    %v206 = vpop.f32.mrf.mxu0
    %v207 = vpop.f32.mrf.mxu0
    %208 = vdwg.mxu0
    %209 = vmatprep.subr.bf16.mxu0 0
    %210 = vmatpush1.bf16.msra.mxu0 %v126
    %211 = vmatprep.subr.bf16.mxu0 0
    %212 = vmatpush1.bf16.msra.mxu0 %v125
    %213 = vmatprep.subr.bf16.mxu0 0
    %214 = vmatpush1.bf16.msra.mxu0 %v124
    %215 = vmatprep.subr.bf16.mxu0 0
    %216 = vmatpush1.bf16.msra.mxu0 %v123
    %217 = vmatprep.subr.bf16.mxu0 0
    %218 = vmatpush1.bf16.msra.mxu0 %v122
    %219 = vmatprep.subr.bf16.mxu0 0
    %220 = vmatpush1.bf16.msra.mxu0 %v121
    %221 = vmatprep.subr.bf16.mxu0 0
    %222 = vmatpush1.bf16.msra.mxu0 %v120
    %223 = vmatprep.subr.bf16.mxu0 0
    %224 = vmatpush1.bf16.msra.mxu0 %v119
    %225 = vmatprep.subr.bf16.mxu0 0
    %226 = vmatpush2.bf16.msra.mxu0 0
    %227 = vmatprep.subr.bf16.mxu0 0
    %228 = vmatpush2.bf16.msra.mxu0 0
    %229 = vmatprep.subr.bf16.mxu0 0
    %230 = vmatpush2.bf16.msra.mxu0 0
    %231 = vmatprep.subr.bf16.mxu0 0
    %232 = vmatpush2.bf16.msra.mxu0 0
    %233 = vmatprep.subr.bf16.mxu0 0
    %234 = vmatpush2.bf16.msra.mxu0 0
    %235 = vmatprep.subr.bf16.mxu0 0
    %236 = vmatpush2.bf16.msra.mxu0 0
    %237 = vmatprep.subr.bf16.mxu0 0
    %238 = vmatpush2.bf16.msra.mxu0 0
    %239 = vmatprep.subr.bf16.mxu0 0
    %240 = vmatpush2.bf16.msra.mxu0 0
    %241 = vmatprep.mubr.bf16.mxu0 0
    %242 = vmatmul.mubr.bf16.gmra.mxu0 %v167
    %v243 = vpop.f32.mrf.mxu0
    %v244 = vadd.f32 %v204, %v243
    %v245 = vpop.f32.mrf.mxu0
    %v246 = vpop.f32.mrf.mxu0
    %v247 = vpop.f32.mrf.mxu0
    %248 = vdwg.mxu0
    %v249 = vadd.f32 %v168, %v244
    %250 = vst [vmem:[#allocation2] sm:$0xff] %v249
    // Predicated region
    $region62: #{tpu_custom_call.1} parent=1 // pred_check
      %p251 = pneg %p98
    $region63: #{tpu_custom_call.1} parent=1 // pred_check_branch
      %253 = sbr.rel (%p251) target = $region65
    $region64: #{tpu_custom_call.1} parent=1 // pred_region
      %v254 = vld [vmem:[#allocation2] sm:$0xff]
      %v255 = vld [vmem:[#allocation9] sm:$0xff]
      %v256 = vld [vmem:[#allocation9 + $0x8] sm:$0xff]
      %v257 = vld [vmem:[#allocation9 + $0x10] sm:$0xff]
      %v258 = vld [vmem:[#allocation9 + $0x18] sm:$0xff]
      %v259 = vld [vmem:[#allocation9 + $0x20] sm:$0xff]
      %v260 = vld [vmem:[#allocation9 + $0x28] sm:$0xff]
      %v261 = vld [vmem:[#allocation9 + $0x30] sm:$0xff]
      %v262 = vld [vmem:[#allocation9 + $0x38] sm:$0xff]
      %v263 = vld [vmem:[#allocation9 + $0x40] sm:$0xff]
      %v264 = vld [vmem:[#allocation9 + $0x48] sm:$0xff]
      %v265 = vld [vmem:[#allocation9 + $0x50] sm:$0xff]
      %v266 = vld [vmem:[#allocation9 + $0x58] sm:$0xff]
      %v267 = vld [vmem:[#allocation9 + $0x60] sm:$0xff]
      %v268 = vld [vmem:[#allocation9 + $0x68] sm:$0xff]
      %v269 = vld [vmem:[#allocation9 + $0x70] sm:$0xff]
      %v270 = vld [vmem:[#allocation9 + $0x78] sm:$0xff]
      %v271 = vld [vmem:[%s4] sm:$0x1]
      %v273 = vlaneseq
      %v274 = vshrl.u32 %v273, 7
      %v275 = vsub.s32 0, %v274
      %v276 = vrot.slane %v271, %v275
      %278 = vmatprep.subr.mxu0 0.0
      %279 = vmatpush1.msra.mxu0 %v270
      %280 = vmatprep.subr.mxu0 0.0
      %281 = vmatpush1.msra.mxu0 %v269
      %282 = vmatprep.subr.mxu0 0.0
      %283 = vmatpush1.msra.mxu0 %v268
      %284 = vmatprep.subr.mxu0 0.0
      %285 = vmatpush1.msra.mxu0 %v267
      %286 = vmatprep.subr.mxu0 0.0
      %287 = vmatpush1.msra.mxu0 %v266
      %288 = vmatprep.subr.mxu0 0.0
      %289 = vmatpush1.msra.mxu0 %v265
      %290 = vmatprep.subr.mxu0 0.0
      %291 = vmatpush1.msra.mxu0 %v264
      %292 = vmatprep.subr.mxu0 0.0
      %293 = vmatpush1.msra.mxu0 %v263
      %294 = vmatprep.subr.mxu0 0.0
      %295 = vmatpush1.msra.mxu0 %v262
      %296 = vmatprep.subr.mxu0 0.0
      %297 = vmatpush1.msra.mxu0 %v261
      %298 = vmatprep.subr.mxu0 0.0
      %299 = vmatpush1.msra.mxu0 %v260
      %300 = vmatprep.subr.mxu0 0.0
      %301 = vmatpush1.msra.mxu0 %v259
      %302 = vmatprep.subr.mxu0 0.0
      %303 = vmatpush1.msra.mxu0 %v258
      %304 = vmatprep.subr.mxu0 0.0
      %305 = vmatpush1.msra.mxu0 %v257
      %306 = vmatprep.subr.mxu0 0.0
      %307 = vmatpush1.msra.mxu0 %v256
      %308 = vmatprep.subr.mxu0 0.0
      %309 = vmatpush1.msra.mxu0 %v255
      %310 = vmatprep.subr.mxu0 0.0
      %311 = vmatpush2.msra.mxu0 0.0
      %312 = vmatprep.subr.mxu0 0.0
      %313 = vmatpush2.msra.mxu0 0.0
      %314 = vmatprep.subr.mxu0 0.0
      %315 = vmatpush2.msra.mxu0 0.0
      %316 = vmatprep.subr.mxu0 0.0
      %317 = vmatpush2.msra.mxu0 0.0
      %318 = vmatprep.subr.mxu0 0.0
      %319 = vmatpush2.msra.mxu0 0.0
      %320 = vmatprep.subr.mxu0 0.0
      %321 = vmatpush2.msra.mxu0 0.0
      %322 = vmatprep.subr.mxu0 0.0
      %323 = vmatpush2.msra.mxu0 0.0
      %324 = vmatprep.subr.mxu0 0.0
      %325 = vmatpush2.msra.mxu0 0.0
      %326 = vmatprep.subr.mxu0 0.0
      %327 = vmatpush2.msra.mxu0 0.0
      %328 = vmatprep.subr.mxu0 0.0
      %329 = vmatpush2.msra.mxu0 0.0
      %330 = vmatprep.subr.mxu0 0.0
      %331 = vmatpush2.msra.mxu0 0.0
      %332 = vmatprep.subr.mxu0 0.0
      %333 = vmatpush2.msra.mxu0 0.0
      %334 = vmatprep.subr.mxu0 0.0
      %335 = vmatpush2.msra.mxu0 0.0
      %336 = vmatprep.subr.mxu0 0.0
      %337 = vmatpush2.msra.mxu0 0.0
      %338 = vmatprep.subr.mxu0 0.0
      %339 = vmatpush2.msra.mxu0 0.0
      %340 = vmatprep.subr.mxu0 0.0
      %341 = vmatpush2.msra.mxu0 0.0
      %342 = vmatprep.mubr.f32.mxu0 0.0
      %343 = vmatmul.mubr.f32.gmra.mxu0 %v254
      %v344 = vpop.f32.mrf.mxu0
      %v345 = vadd.f32 %v276, %v344
      %v346 = vpop.f32.mrf.mxu0
      %347 = vdwg.mxu0
      %v348 = vmax.f32 %v345, 0.0
      %v349 = vld [vmem:[#allocation11] sm:$0xff]
      %v350 = vld [vmem:[#allocation11 + $0x8] sm:$0xff]
      %v351 = vld [vmem:[#allocation11 + $0x10] sm:$0xff]
      %v352 = vld [vmem:[#allocation11 + $0x18] sm:$0xff]
      %v353 = vld [vmem:[#allocation11 + $0x20] sm:$0xff]
      %v354 = vld [vmem:[#allocation11 + $0x28] sm:$0xff]
      %v355 = vld [vmem:[#allocation11 + $0x30] sm:$0xff]
      %v356 = vld [vmem:[#allocation11 + $0x38] sm:$0xff]
      %v357 = vld [vmem:[#allocation11 + $0x40] sm:$0xff]
      %v358 = vld [vmem:[#allocation11 + $0x48] sm:$0xff]
      %v359 = vld [vmem:[#allocation11 + $0x50] sm:$0xff]
      %v360 = vld [vmem:[#allocation11 + $0x58] sm:$0xff]
      %v361 = vld [vmem:[#allocation11 + $0x60] sm:$0xff]
      %v362 = vld [vmem:[#allocation11 + $0x68] sm:$0xff]
      %v363 = vld [vmem:[#allocation11 + $0x70] sm:$0xff]
      %v364 = vld [vmem:[#allocation11 + $0x78] sm:$0xff]
      %v365 = vld [vmem:[%s6] sm:$0x1]
      %v367 = vlaneseq
      %v368 = vshrl.u32 %v367, 7
      %v369 = vsub.s32 0, %v368
      %v370 = vrot.slane %v365, %v369
      %372 = vmatprep.subr.mxu0 0.0
      %373 = vmatpush1.msra.mxu0 %v364
      %374 = vmatprep.subr.mxu0 0.0
      %375 = vmatpush1.msra.mxu0 %v363
      %376 = vmatprep.subr.mxu0 0.0
      %377 = vmatpush1.msra.mxu0 %v362
      %378 = vmatprep.subr.mxu0 0.0
      %379 = vmatpush1.msra.mxu0 %v361
      %380 = vmatprep.subr.mxu0 0.0
      %381 = vmatpush1.msra.mxu0 %v360
      %382 = vmatprep.subr.mxu0 0.0
      %383 = vmatpush1.msra.mxu0 %v359
      %384 = vmatprep.subr.mxu0 0.0
      %385 = vmatpush1.msra.mxu0 %v358
      %386 = vmatprep.subr.mxu0 0.0
      %387 = vmatpush1.msra.mxu0 %v357
      %388 = vmatprep.subr.mxu0 0.0
      %389 = vmatpush1.msra.mxu0 %v356
      %390 = vmatprep.subr.mxu0 0.0
      %391 = vmatpush1.msra.mxu0 %v355
      %392 = vmatprep.subr.mxu0 0.0
      %393 = vmatpush1.msra.mxu0 %v354
      %394 = vmatprep.subr.mxu0 0.0
      %395 = vmatpush1.msra.mxu0 %v353
      %396 = vmatprep.subr.mxu0 0.0
      %397 = vmatpush1.msra.mxu0 %v352
      %398 = vmatprep.subr.mxu0 0.0
      %399 = vmatpush1.msra.mxu0 %v351
      %400 = vmatprep.subr.mxu0 0.0
      %401 = vmatpush1.msra.mxu0 %v350
      %402 = vmatprep.subr.mxu0 0.0
      %403 = vmatpush1.msra.mxu0 %v349
      %404 = vmatprep.subr.mxu0 0.0
      %405 = vmatpush2.msra.mxu0 0.0
      %406 = vmatprep.subr.mxu0 0.0
      %407 = vmatpush2.msra.mxu0 0.0
      %408 = vmatprep.subr.mxu0 0.0
      %409 = vmatpush2.msra.mxu0 0.0
      %410 = vmatprep.subr.mxu0 0.0
      %411 = vmatpush2.msra.mxu0 0.0
      %412 = vmatprep.subr.mxu0 0.0
      %413 = vmatpush2.msra.mxu0 0.0
      %414 = vmatprep.subr.mxu0 0.0
      %415 = vmatpush2.msra.mxu0 0.0
      %416 = vmatprep.subr.mxu0 0.0
      %417 = vmatpush2.msra.mxu0 0.0
      %418 = vmatprep.subr.mxu0 0.0
      %419 = vmatpush2.msra.mxu0 0.0
      %420 = vmatprep.subr.mxu0 0.0
      %421 = vmatpush2.msra.mxu0 0.0
      %422 = vmatprep.subr.mxu0 0.0
      %423 = vmatpush2.msra.mxu0 0.0
      %424 = vmatprep.subr.mxu0 0.0
      %425 = vmatpush2.msra.mxu0 0.0
      %426 = vmatprep.subr.mxu0 0.0
      %427 = vmatpush2.msra.mxu0 0.0
      %428 = vmatprep.subr.mxu0 0.0
      %429 = vmatpush2.msra.mxu0 0.0
      %430 = vmatprep.subr.mxu0 0.0
      %431 = vmatpush2.msra.mxu0 0.0
      %432 = vmatprep.subr.mxu0 0.0
      %433 = vmatpush2.msra.mxu0 0.0
      %434 = vmatprep.subr.mxu0 0.0
      %435 = vmatpush2.msra.mxu0 0.0
      %436 = vmatprep.mubr.f32.mxu0 0.0
      %437 = vmatmul.mubr.f32.gmra.mxu0 %v348
      %v438 = vpop.f32.mrf.mxu0
      %v439 = vadd.f32 %v370, %v438
      %v440 = vpop.f32.mrf.mxu0
      %441 = vdwg.mxu0
      %442 = vadd.xlane.f32.xlu0 %v439
      %v443 = vpop.xlane.xlu0 %442
      %v444 = vmul.f32 %v443, 0.03125
      %v445 = vlaneseq
      %v446 = vand.u32 %v445, 127
      %vm447 = vcmp.lt.s32.totalorder %v446, 32
      %v448 = vsub.f32 %v439, %v444
      %v449 = vsel %vm447, %v448, 0.0
      %v450 = vmul.f32 %v449, %v449
      %451 = vadd.xlane.f32.xlu0 %v450
      %v452 = vpop.xlane.xlu0 %451
      %v453 = vmul.f32 %v452, 0.03125
      %v454 = vadd.f32 %v453, 1e-05
      %v455 = vrsqrt.pop %v454
      %v456 = vmul.f32 %v449, %v455
      %v457 = vld [vmem:[%s7] sm:$0x1]
      %v459 = vlaneseq
      %v460 = vshrl.u32 %v459, 7
      %v461 = vsub.s32 0, %v460
      %v462 = vrot.slane %v457, %v461
      %v464 = vmul.f32 %v456, %v462
      %v465 = vld [vmem:[%s8] sm:$0x1]
      %v467 = vlaneseq
      %v468 = vshrl.u32 %v467, 7
      %v469 = vsub.s32 0, %v468
      %v470 = vrot.slane %v465, %v469
      %v472 = vadd.f32 %v464, %v470
      %v473 = vmax.f32 %v472, 0.0
      %v474 = vld [vmem:[#allocation8] sm:$0xff]
      %v475 = vadd.f32 %v473, %v474
      %476 = vst [vmem:[#allocation12] sm:$0xff] %v475
    $region65: #{tpu_custom_call.1} parent=1 // pred_fallthru
      _
    // Predicated region
    $region66: #{tpu_custom_call.1} parent=1 // pred_check
      _
    $region67: #{tpu_custom_call.1} parent=1 // pred_check_branch
      %478 = sbr.rel (0) target = $region69
    $region68: #{tpu_custom_call.1} parent=1 // pred_region
      %s480 = ssub.s32 128, 128
      %481 = vsyncadd [#allocation5], %s480
      %s483 = sshll.u32 [#allocation12], 4
      %s484 = int_to_ptr.vmem [resolvable:$true] %s483
      %486 = dma.vmem_to_hbm [thread:$0]  %s484, 128, %s9, [#allocation5]
    $region69: #{tpu_custom_call.1} parent=1 // pred_fallthru
      _
    // Predicated region
    $region70: #{tpu_custom_call.1} parent=1 // pred_check
      _
    $region71: #{tpu_custom_call.1} parent=1 // pred_check_branch
      %488 = sbr.rel (0) target = $region73
    $region72: #{tpu_custom_call.1} parent=1 // pred_region
      %489 = dma.done [#allocation5], 128
    $region73: #{tpu_custom_call.1} parent=1 // pred_fallthru
      _
    %490 = vsyncpa [#allocation4], 1
    %491 = vsyncpa [#allocation7], 1
    %492 = vsyncpa [#allocation10], 1
    %493 = vsyncpa [#allocation5], 1

</llo_original>
